<compile_context>
chip_gen: v7x
topology: tpu7x:2x2x1
jax: 0.10.0
libtpu: 0.0.40
codegen_flags: <defaults>
</compile_context>

<pallas_src>
import functools

import jax
import jax.numpy as jnp
from jax.experimental import pallas as pl
from jax.experimental.pallas import tpu as pltpu

_EPS = 1e-5


# ----------------------------------------------------------------------------- helpers
def _vmem_capacity_bytes():
    try:
        return int(pltpu.get_tpu_info().vmem_capacity_bytes)
    except Exception:
        return 64 * 1024 * 1024  # safe lower bound (v7x per-TC)


def _is_v5():
    try:
        return "v5" in jax.devices()[0].device_kind.lower()
    except Exception:
        return False


def _vmem_limit(data_bytes, vmem_cap):
    limit = max(16 * 1024 * 1024, int(data_bytes) + 8 * 1024 * 1024)
    return int(min(limit, int(vmem_cap * 0.85)))


def _se_gate(mean_x, wa_ref, wb_ref, ch_axis, spatial_axis):
    """SE gate on the VPU from the per-(N,C) pooled mean (broadcast-mul + reduce)."""
    wa = wa_ref[...].astype(jnp.float32)
    wb = wb_ref[...].astype(jnp.float32)
    h = jnp.sum(mean_x * wa[None, :, :], axis=ch_axis, keepdims=True)
    h = jnp.maximum(h, 0.0)                                   # ReLU
    g = jnp.sum(wb[None, :, :] * h, axis=spatial_axis, keepdims=True)
    return jax.nn.sigmoid(g)                                  # same shape as mean_x


# ----------------------------------------------------------------------------- fused kernel
def _seadain_fused_kernel(x_ref, t_ref, wa_ref, wb_ref, o_ref, *,
                          spatial_axis, apply_in_f32):
    # channels-first: blocks (Nb, C, HW), spatial_axis=2, wa=W1.T (C,Cr), wb=W2 (C,Cr)
    # channels-last : blocks (Nb, HW, C), spatial_axis=1, wa=W1 (Cr,C),  wb=W2.T (Cr,C)
    ch_axis = 3 - spatial_axis
    x_raw = x_ref[...]
    t_raw = t_ref[...]

    hw = x_raw.shape[spatial_axis]
    inv_hw = 1.0 / hw
    inv_hw1 = 1.0 / (hw - 1)          # unbiased variance (torch default)

    # Single-pass stats with f32 accumulation (no explicit full-slab f32 temps).
    s1x = jnp.sum(x_raw, axis=spatial_axis, keepdims=True, dtype=jnp.float32)
    s2x = jnp.sum(x_raw * x_raw, axis=spatial_axis, keepdims=True, dtype=jnp.float32)
    s1t = jnp.sum(t_raw, axis=spatial_axis, keepdims=True, dtype=jnp.float32)
    s2t = jnp.sum(t_raw * t_raw, axis=spatial_axis, keepdims=True, dtype=jnp.float32)

    mean_x = s1x * inv_hw
    var_x = jnp.maximum((s2x - s1x * mean_x) * inv_hw1, 0.0)
    mean_t = s1t * inv_hw
    var_t = jnp.maximum((s2t - s1t * mean_t) * inv_hw1, 0.0)
    t_std = jnp.sqrt(var_t + _EPS)

    gate = _se_gate(mean_x, wa_ref, wb_ref, ch_axis, spatial_axis)

    # Fold gate into the AdaIN affine (eps added AFTER the gate^2 scaling).
    inv_xs_std = jax.lax.rsqrt(gate * gate * var_x + _EPS)
    scale = gate * t_std * inv_xs_std
    bias = mean_t - mean_x * scale

    if apply_in_f32:
        out = x_raw.astype(jnp.float32) * scale + bias
    else:
        out = x_raw * scale.astype(x_raw.dtype) + bias.astype(x_raw.dtype)
    o_ref[...] = out.astype(o_ref.dtype)


# ----------------------------------------------------------------------------- split path (large slabs)
def _seadain_stats_kernel(x_ref, t_ref, wa_ref, wb_ref, scale_ref, bias_ref,
                          s1x, s2x, s1t, s2t, *, hw_total, hw_block):
    j = pl.program_id(1)

    @pl.when(j == 0)
    def _init():
        s1x[...] = jnp.zeros_like(s1x)
        s2x[...] = jnp.zeros_like(s2x)
        s1t[...] = jnp.zeros_like(s1t)
        s2t[...] = jnp.zeros_like(s2t)

    x = x_ref[...]
    t = t_ref[...]
    if hw_total % hw_block != 0:      # static: only mask when a padded tail exists
        lane = jax.lax.broadcasted_iota(jnp.int32, x.shape, dimension=2)
        valid = lane < (hw_total - j * hw_block)
        x = jnp.where(valid, x, jnp.zeros_like(x))
        t = jnp.where(valid, t, jnp.zeros_like(t))

    s1x[...] += jnp.sum(x, axis=2, keepdims=True, dtype=jnp.float32)
    s2x[...] += jnp.sum(x * x, axis=2, keepdims=True, dtype=jnp.float32)
    s1t[...] += jnp.sum(t, axis=2, keepdims=True, dtype=jnp.float32)
    s2t[...] += jnp.sum(t * t, axis=2, keepdims=True, dtype=jnp.float32)

    @pl.when(j == pl.num_programs(1) - 1)
    def _finalize():
        inv_hw = 1.0 / hw_total
        inv_hw1 = 1.0 / (hw_total - 1)
        mean_x = s1x[...] * inv_hw
        var_x = jnp.maximum((s2x[...] - s1x[...] * mean_x) * inv_hw1, 0.0)
        mean_t = s1t[...] * inv_hw
        var_t = jnp.maximum((s2t[...] - s1t[...] * mean_t) * inv_hw1, 0.0)
        t_std = jnp.sqrt(var_t + _EPS)

        gate = _se_gate(mean_x, wa_ref, wb_ref, ch_axis=1, spatial_axis=2)

        inv_xs_std = jax.lax.rsqrt(gate * gate * var_x + _EPS)
        scale = gate * t_std * inv_xs_std
        scale_ref[...] = scale
        bias_ref[...] = mean_t - mean_x * scale


def _seadain_apply_kernel(x_ref, scale_ref, bias_ref, o_ref, *, apply_in_f32):
    x = x_ref[...]
    s = scale_ref[...]
    b = bias_ref[...]
    if apply_in_f32:
        out = x.astype(jnp.float32) * s + b
    else:
        out = x * s.astype(x.dtype) + b.astype(x.dtype)
    o_ref[...] = out.astype(o_ref.dtype)


def _seadain_split(x2, t2, w1t, w2, *, n, c, hw, c_red, itemsize,
                   tile_budget, vmem_cap, apply_in_f32, hw_block=None):
    """Two-call path for slabs that don't fit the fused-kernel VMEM budget."""
    if hw_block is None:
        max_lanes = max(128, (tile_budget // max(1, c * itemsize)) // 128 * 128)
        hw_block = hw if hw <= max_lanes else max_lanes
    hw_block = max(1, min(hw_block, hw))
    grid = (n, pl.cdiv(hw, hw_block))
    block_bytes = c * hw_block * itemsize

    stats_kernel = functools.partial(_seadain_stats_kernel,
                                     hw_total=hw, hw_block=hw_block)
    scale, bias = pl.pallas_call(
        stats_kernel,
        out_shape=(jax.ShapeDtypeStruct((n, c, 1), jnp.float32),
                   jax.ShapeDtypeStruct((n, c, 1), jnp.float32)),
        grid_spec=pltpu.PrefetchScalarGridSpec(
            num_scalar_prefetch=0,
            grid=grid,
            in_specs=[
                pl.BlockSpec((1, c, hw_block), lambda i, j: (i, 0, j)),
                pl.BlockSpec((1, c, hw_block), lambda i, j: (i, 0, j)),
                pl.BlockSpec((c, c_red), lambda i, j: (0, 0)),
                pl.BlockSpec((c, c_red), lambda i, j: (0, 0)),
            ],
            out_specs=[
                pl.BlockSpec((1, c, 1), lambda i, j: (i, 0, 0)),
                pl.BlockSpec((1, c, 1), lambda i, j: (i, 0, 0)),
            ],
            scratch_shapes=[pltpu.VMEM((1, c, 1), jnp.float32)] * 4,
        ),
        compiler_params=pltpu.CompilerParams(
            dimension_semantics=("parallel", "arbitrary"),
            vmem_limit_bytes=_vmem_limit(2 * 2 * block_bytes, vmem_cap),
        ),
    )(x2, t2, w1t, w2)

    out = pl.pallas_call(
        functools.partial(_seadain_apply_kernel, apply_in_f32=apply_in_f32),
        out_shape=jax.ShapeDtypeStruct((n, c, hw), x2.dtype),
        grid_spec=pltpu.PrefetchScalarGridSpec(
            num_scalar_prefetch=0,
            grid=grid,
            in_specs=[
                pl.BlockSpec((1, c, hw_block), lambda i, j: (i, 0, j)),
                pl.BlockSpec((1, c, 1), lambda i, j: (i, 0, 0)),
                pl.BlockSpec((1, c, 1), lambda i, j: (i, 0, 0)),
            ],
            out_specs=pl.BlockSpec((1, c, hw_block), lambda i, j: (i, 0, j)),
        ),
        compiler_params=pltpu.CompilerParams(
            dimension_semantics=("parallel", "parallel"),
            vmem_limit_bytes=_vmem_limit(2 * 2 * block_bytes, vmem_cap),
        ),
    )(x2, scale, bias)
    return out


# ----------------------------------------------------------------------------- wrapper
def seadain_pallas(x, target, w1, w2, *, force_split=False, split_hw_block=None):
    """x, target: (N, C, H, W); w1: (C//r, C); w2: (C, C//r). Returns (N, C, H, W)."""
    n, c, hgt, wid = x.shape
    hw = hgt * wid
    if hw < 2:
        # torch's unbiased variance would be NaN for H*W == 1; be explicit instead.
        raise ValueError("SEAdaIN requires H*W >= 2 (unbiased variance).")
    c_red = w1.shape[0]
    itemsize = jnp.dtype(x.dtype).itemsize
    per_elem_bytes = c * hw * itemsize

    vmem_cap = _vmem_capacity_bytes()
    # Per-tensor tile budget: ~8 MiB on 128 MiB parts (v5e/v6e), ~4 MiB on v7x.
    tile_budget = max(1 << 20, min(8 << 20, vmem_cap // 16))
    # v5e has no bf16 VALU -> do the apply FMA in f32 there; f32 inputs are f32 anyway.
    apply_in_f32 = (x.dtype == jnp.float32) or _is_v5()

    if force_split or per_elem_bytes > tile_budget:
        x2 = x.reshape(n, c, hw)
        t2 = target.reshape(n, c, hw)
        out = _seadain_split(x2, t2, w1.T, w2, n=n, c=c, hw=hw, c_red=c_red,
                             itemsize=itemsize, tile_budget=tile_budget,
                             vmem_cap=vmem_cap, apply_in_f32=apply_in_f32,
                             hw_block=split_hw_block)
        return out.reshape(n, c, hgt, wid)

    # Lane-dense layout choice: keep channels-first when HW is already a multiple
    # of 128; otherwise fold to channels-last if C is a multiple of 128 so the
    # hot-loop stores stay unmasked lane-dense vst.
    channels_last = (hw % 128 != 0) and (c % 128 == 0)
    if channels_last:
        x2 = x.reshape(n, c, hw).transpose(0, 2, 1)      # (N, HW, C)
        t2 = target.reshape(n, c, hw).transpose(0, 2, 1)
        wa, wb = w1, w2.T                                # (Cr, C), (Cr, C)
        spatial_axis = 1
        data_block_of = lambda nb: (nb, hw, c)
    else:
        x2 = x.reshape(n, c, hw)                         # (N, C, HW)
        t2 = target.reshape(n, c, hw)
        wa, wb = w1.T, w2                                # (C, Cr), (C, Cr)
        spatial_axis = 2
        data_block_of = lambda nb: (nb, c, hw)

    # Batch-block size: as big as the VMEM budget allows, but guarantee >= 2 grid
    # steps when N >= 2 (megacore + pipelining) and prefer >= ~4 steps subject to
    # a ~512 KiB tile floor (HBM-roofline knee). cdiv grid -> no divisor fallback.
    nb = min(n, max(1, tile_budget // per_elem_bytes))
    if n >= 2:
        nb = min(nb, max(1, n // 2))
    nb_floor = max(1, (512 * 1024) // per_elem_bytes)
    nb_for_steps = max(1, n // 4)
    nb = min(nb, max(nb_for_steps, min(nb_floor, nb)))
    grid = (pl.cdiv(n, nb),)

    data_block = data_block_of(nb)
    tile_bytes = nb * per_elem_bytes
    w_bytes = (wa.size + wb.size) * jnp.dtype(wa.dtype).itemsize
    vmem_limit = _vmem_limit(2 * 3 * tile_bytes + 2 * w_bytes, vmem_cap)

    kernel = functools.partial(_seadain_fused_kernel,
                               spatial_axis=spatial_axis,
                               apply_in_f32=apply_in_f32)
    out = pl.pallas_call(
        kernel,
        out_shape=jax.ShapeDtypeStruct(x2.shape, x.dtype),
        grid_spec=pltpu.PrefetchScalarGridSpec(
            num_scalar_prefetch=0,
            grid=grid,
            in_specs=[
                pl.BlockSpec(data_block, lambda i: (i, 0, 0)),
                pl.BlockSpec(data_block, lambda i: (i, 0, 0)),
                pl.BlockSpec(wa.shape, lambda i: (0, 0)),
                pl.BlockSpec(wb.shape, lambda i: (0, 0)),
            ],
            out_specs=pl.BlockSpec(data_block, lambda i: (i, 0, 0)),
        ),
        compiler_params=pltpu.CompilerParams(
            dimension_semantics=("parallel",),
            vmem_limit_bytes=vmem_limit,
        ),
        cost_estimate=pl.CostEstimate(
            flops=10 * n * c * hw + 4 * n * c * c_red,
            transcendentals=3 * n * c,
            bytes_accessed=3 * n * c * hw * itemsize + 2 * c * c_red * itemsize,
        ),
    )(x2, t2, wa, wb)

    if channels_last:
        out = out.transpose(0, 2, 1)
    return out.reshape(n, c, hgt, wid)


# ----------------------------------------------------------------------------- pure-JAX reference
def seadain_reference(x, target, w1, w2, eps=_EPS):
    """Pure-JAX reference matching the PyTorch module (centered unbiased var)."""
    n, c, hgt, wid = x.shape
    hw = hgt * wid
    pooled = jnp.mean(x.reshape(n, c, hw), axis=2)                   # (N, C)
    h = jnp.maximum(pooled @ w1.T, 0.0)                              # (N, C//r)
    gate = jax.nn.sigmoid(h @ w2.T)                                  # (N, C)
    xs = x * gate[:, :, None, None]

    def mean_std(f):
        flat = f.reshape(n, c, hw)
        m = jnp.mean(flat, axis=2)
        v = jnp.sum((flat - m[:, :, None]) ** 2, axis=2) / (hw - 1) + eps
        return m[:, :, None, None], jnp.sqrt(v)[:, :, None, None]

    xm, xsd = mean_std(xs)
    tm, tsd = mean_std(target)
    return (xs - xm) / xsd * tsd + tm


# ----------------------------------------------------------------------------- demo / self-test
if __name__ == "__main__":
    def make_case(key, n, c, h, w, reduction=8):
        cr = max(1, c // reduction)
        k1, k2, k3, k4 = jax.random.split(key, 4)
        xx = jax.random.normal(k1, (n, c, h, w), dtype=jnp.float32)
        tt = jax.random.normal(k2, (n, c, h, w), dtype=jnp.float32)
        # PyTorch Linear weight layout: (out_features, in_features), no biases.
        ww1 = 0.2 * jax.random.normal(k3, (cr, c), dtype=jnp.float32)
        ww2 = 0.2 * jax.random.normal(k4, (c, cr), dtype=jnp.float32)
        return xx, tt, ww1, ww2

    key = jax.random.PRNGKey(0)
    k1, k2, k3 = jax.random.split(key, 3)

    # 1) fused path, channels-first layout (HW = 256 is a multiple of 128); grid=(2,).
    x, t, w1, w2 = make_case(k1, 2, 16, 16, 16)
    out = jax.block_until_ready(seadain_pallas(x, t, w1, w2))
    ref = seadain_reference(x, t, w1, w2)
    assert out.shape == x.shape
    assert jnp.allclose(out, ref, atol=1e-4, rtol=1e-4), "fused channels-first mismatch"

    # 2) fused path, lane-dense channels-last fold (HW = 49 not /128, C = 128).
    x, t, w1, w2 = make_case(k2, 2, 128, 7, 7)
    out = jax.block_until_ready(seadain_pallas(x, t, w1, w2))
    ref = seadain_reference(x, t, w1, w2)
    assert jnp.allclose(out, ref, atol=1e-4, rtol=1e-4), "fused channels-last mismatch"

    # 3) split (large-slab) path: stats-accumulate over HW blocks + tiled apply,
    #    with a masked non-divisible tail (HW = 400, block = 128).
    x, t, w1, w2 = make_case(k3, 2, 16, 20, 20)
    out = jax.block_until_ready(
        seadain_pallas(x, t, w1, w2, force_split=True, split_hw_block=128))
    ref = seadain_reference(x, t, w1, w2)
    assert jnp.allclose(out, ref, atol=1e-4, rtol=1e-4), "split path mismatch"

    print("KERNEL_OK")
</pallas_src>

<mosaic_0001>
module attributes {stable_mosaic.version = 11 : i64} {
  func.func @_seadain_fused_kernel(%arg0: i32, %arg1: memref<1x16x256xf32, #tpu.memory_space<vmem>>, %arg2: memref<1x16x256xf32, #tpu.memory_space<vmem>>, %arg3: memref<16x2xf32, #tpu.memory_space<vmem>>, %arg4: memref<16x2xf32, #tpu.memory_space<vmem>>, %arg5: memref<1x16x256xf32, #tpu.memory_space<vmem>>) attributes {dimension_semantics = [#tpu.dimension_semantics<parallel>], iteration_bounds = array<i64: 2>, scalar_prefetch = 0 : i64, scratch_operands = 0 : i64, tpu.core_type = #tpu.core_type<tc>, window_params = [{transform_indices = @transform_0, window_bounds = array<i64: 1, 16, 256>}, {transform_indices = @transform_1, window_bounds = array<i64: 1, 16, 256>}, {pipeline_mode = #tpu.pipeline_mode<synchronous>, transform_indices = @transform_2, window_bounds = array<i64: 16, 2>}, {pipeline_mode = #tpu.pipeline_mode<synchronous>, transform_indices = @transform_3, window_bounds = array<i64: 16, 2>}, {transform_indices = @transform_4, window_bounds = array<i64: 1, 16, 256>}]} {
    %c0 = arith.constant 0 : index
    %c0_0 = arith.constant 0 : index
    %c0_1 = arith.constant 0 : index
    %0 = vector.load %arg1[%c0, %c0_0, %c0_1] : memref<1x16x256xf32, #tpu.memory_space<vmem>>, vector<1x16x256xf32>
    %c0_2 = arith.constant 0 : index
    %c0_3 = arith.constant 0 : index
    %c0_4 = arith.constant 0 : index
    %1 = vector.load %arg2[%c0_2, %c0_3, %c0_4] : memref<1x16x256xf32, #tpu.memory_space<vmem>>, vector<1x16x256xf32>
    %cst = arith.constant dense<0.000000e+00> : vector<1x16xf32>
    %2 = vector.multi_reduction <add>, %0, %cst [2] : vector<1x16x256xf32> to vector<1x16xf32>
    %3 = vector.shape_cast %2 : vector<1x16xf32> to vector<1x16x1xf32>
    %4 = arith.mulf %0, %0 : vector<1x16x256xf32>
    %cst_5 = arith.constant dense<0.000000e+00> : vector<1x16xf32>
    %5 = vector.multi_reduction <add>, %4, %cst_5 [2] : vector<1x16x256xf32> to vector<1x16xf32>
    %6 = vector.shape_cast %5 : vector<1x16xf32> to vector<1x16x1xf32>
    %cst_6 = arith.constant dense<0.000000e+00> : vector<1x16xf32>
    %7 = vector.multi_reduction <add>, %1, %cst_6 [2] : vector<1x16x256xf32> to vector<1x16xf32>
    %8 = vector.shape_cast %7 : vector<1x16xf32> to vector<1x16x1xf32>
    %9 = arith.mulf %1, %1 : vector<1x16x256xf32>
    %cst_7 = arith.constant dense<0.000000e+00> : vector<1x16xf32>
    %10 = vector.multi_reduction <add>, %9, %cst_7 [2] : vector<1x16x256xf32> to vector<1x16xf32>
    %11 = vector.shape_cast %10 : vector<1x16xf32> to vector<1x16x1xf32>
    %cst_8 = arith.constant 3.906250e-03 : f32
    %12 = vector.broadcast %cst_8 : f32 to vector<1x16x1xf32>
    %13 = arith.mulf %3, %12 : vector<1x16x1xf32>
    %14 = arith.mulf %3, %13 : vector<1x16x1xf32>
    %15 = arith.subf %6, %14 : vector<1x16x1xf32>
    %cst_9 = arith.constant 0.00392156886 : f32
    %16 = vector.broadcast %cst_9 : f32 to vector<1x16x1xf32>
    %17 = arith.mulf %15, %16 : vector<1x16x1xf32>
    %cst_10 = arith.constant 0.000000e+00 : f32
    %18 = vector.broadcast %cst_10 : f32 to vector<1x16x1xf32>
    %19 = arith.maximumf %17, %18 : vector<1x16x1xf32>
    %cst_11 = arith.constant 3.906250e-03 : f32
    %20 = vector.broadcast %cst_11 : f32 to vector<1x16x1xf32>
    %21 = arith.mulf %8, %20 : vector<1x16x1xf32>
    %22 = arith.mulf %8, %21 : vector<1x16x1xf32>
    %23 = arith.subf %11, %22 : vector<1x16x1xf32>
    %cst_12 = arith.constant 0.00392156886 : f32
    %24 = vector.broadcast %cst_12 : f32 to vector<1x16x1xf32>
    %25 = arith.mulf %23, %24 : vector<1x16x1xf32>
    %cst_13 = arith.constant 0.000000e+00 : f32
    %26 = vector.broadcast %cst_13 : f32 to vector<1x16x1xf32>
    %27 = arith.maximumf %25, %26 : vector<1x16x1xf32>
    %cst_14 = arith.constant 9.99999974E-6 : f32
    %28 = vector.broadcast %cst_14 : f32 to vector<1x16x1xf32>
    %29 = arith.addf %27, %28 : vector<1x16x1xf32>
    %30 = math.sqrt %29 : vector<1x16x1xf32>
    %c0_15 = arith.constant 0 : index
    %c0_16 = arith.constant 0 : index
    %31 = vector.load %arg3[%c0_15, %c0_16] : memref<16x2xf32, #tpu.memory_space<vmem>>, vector<16x2xf32>
    %c0_17 = arith.constant 0 : index
    %c0_18 = arith.constant 0 : index
    %32 = vector.load %arg4[%c0_17, %c0_18] : memref<16x2xf32, #tpu.memory_space<vmem>>, vector<16x2xf32>
    %33 = vector.shape_cast %31 : vector<16x2xf32> to vector<1x16x2xf32>
    %34 = vector.broadcast %13 : vector<1x16x1xf32> to vector<1x16x2xf32>
    %35 = arith.mulf %34, %33 : vector<1x16x2xf32>
    %cst_19 = arith.constant dense<0.000000e+00> : vector<1x2xf32>
    %36 = vector.multi_reduction <add>, %35, %cst_19 [1] : vector<1x16x2xf32> to vector<1x2xf32>
    %37 = vector.shape_cast %36 : vector<1x2xf32> to vector<1x1x2xf32>
    %cst_20 = arith.constant 0.000000e+00 : f32
    %38 = vector.broadcast %cst_20 : f32 to vector<1x1x2xf32>
    %39 = arith.maximumf %37, %38 : vector<1x1x2xf32>
    %40 = vector.shape_cast %32 : vector<16x2xf32> to vector<1x16x2xf32>
    %41 = vector.broadcast %39 : vector<1x1x2xf32> to vector<1x16x2xf32>
    %42 = arith.mulf %40, %41 : vector<1x16x2xf32>
    %cst_21 = arith.constant dense<0.000000e+00> : vector<1x16xf32>
    %43 = vector.multi_reduction <add>, %42, %cst_21 [2] : vector<1x16x2xf32> to vector<1x16xf32>
    %44 = vector.shape_cast %43 : vector<1x16xf32> to vector<1x16x1xf32>
    %45 = arith.negf %44 : vector<1x16x1xf32>
    %46 = math.exp %45 : vector<1x16x1xf32>
    %cst_22 = arith.constant 1.000000e+00 : f32
    %47 = vector.broadcast %cst_22 : f32 to vector<1x16x1xf32>
    %48 = arith.addf %47, %46 : vector<1x16x1xf32>
    %49 = arith.divf %47, %48 : vector<1x16x1xf32>
    %50 = arith.mulf %49, %49 : vector<1x16x1xf32>
    %51 = arith.mulf %50, %19 : vector<1x16x1xf32>
    %cst_23 = arith.constant 9.99999974E-6 : f32
    %52 = vector.broadcast %cst_23 : f32 to vector<1x16x1xf32>
    %53 = arith.addf %51, %52 : vector<1x16x1xf32>
    %54 = math.rsqrt %53 : vector<1x16x1xf32>
    %55 = arith.mulf %49, %30 : vector<1x16x1xf32>
    %56 = arith.mulf %55, %54 : vector<1x16x1xf32>
    %57 = arith.mulf %13, %56 : vector<1x16x1xf32>
    %58 = arith.subf %21, %57 : vector<1x16x1xf32>
    %59 = vector.broadcast %56 : vector<1x16x1xf32> to vector<1x16x256xf32>
    %60 = arith.mulf %0, %59 : vector<1x16x256xf32>
    %61 = vector.broadcast %58 : vector<1x16x1xf32> to vector<1x16x256xf32>
    %62 = arith.addf %60, %61 : vector<1x16x256xf32>
    %c0_24 = arith.constant 0 : index
    %c0_25 = arith.constant 0 : index
    %c0_26 = arith.constant 0 : index
    %63 = vector.load %arg5[%c0_24, %c0_25, %c0_26] : memref<1x16x256xf32, #tpu.memory_space<vmem>>, vector<1x16x256xf32>
    tpu.vector_store %arg5[%c0_24, %c0_25, %c0_26], %62 {strides = array<i32>} : memref<1x16x256xf32, #tpu.memory_space<vmem>>, vector<1x16x256xf32>,
    return
  }
  func.func @transform_0(%arg0: i32) -> (i32, i32, i32) {
    %c0_i32 = arith.constant 0 : i32
    %c0_i32_0 = arith.constant 0 : i32
    %c0_i32_1 = arith.constant 0 : i32
    return %arg0, %c0_i32, %c0_i32_0 : i32, i32, i32
  }
  func.func @transform_1(%arg0: i32) -> (i32, i32, i32) {
    %c0_i32 = arith.constant 0 : i32
    %c0_i32_0 = arith.constant 0 : i32
    %c0_i32_1 = arith.constant 0 : i32
    return %arg0, %c0_i32, %c0_i32_0 : i32, i32, i32
  }
  func.func @transform_2(%arg0: i32) -> (i32, i32) {
    %c0_i32 = arith.constant 0 : i32
    %c0_i32_0 = arith.constant 0 : i32
    %c0_i32_1 = arith.constant 0 : i32
    return %c0_i32, %c0_i32_0 : i32, i32
  }
  func.func @transform_3(%arg0: i32) -> (i32, i32) {
    %c0_i32 = arith.constant 0 : i32
    %c0_i32_0 = arith.constant 0 : i32
    %c0_i32_1 = arith.constant 0 : i32
    return %c0_i32, %c0_i32_0 : i32, i32
  }
  func.func @transform_4(%arg0: i32) -> (i32, i32, i32) {
    %c0_i32 = arith.constant 0 : i32
    %c0_i32_0 = arith.constant 0 : i32
    %c0_i32_1 = arith.constant 0 : i32
    return %arg0, %c0_i32, %c0_i32_0 : i32, i32, i32
  }
}

</mosaic_0001>

<llo_original>
// kernel: tpu_custom_call.1
$region0: #{tpu_custom_call.1}
  #allocation0 [shape = 'u32[]', space=smem, size = 0x4, offset = 0x4, fixed_abs, tag = 'smem constant byte address 0x4 - core index']
  #allocation1 [shape = 'u32[144,128]{1,0:T(1,128)}', space=vmem, size = 0x12000, scoped, tag = 'internal scratch']
  %s0 = inlined_call_operand.hbm [shape: f32[2,16,256], index: 0, kind: input, shape index: {}]
  %s1 = inlined_call_operand.hbm [shape: f32[2,16,256], index: 1, kind: input, shape index: {}]
  %s2 = inlined_call_operand.vmem [shape: f32[16,2], index: 2, kind: input, shape index: {}]
  %s3 = inlined_call_operand.vmem [shape: f32[16,2], index: 3, kind: input, shape index: {}]
  %s4 = inlined_call_operand.hbm [shape: f32[2,16,256], index: 4, kind: output, shape index: {}]
  %s5 = sld [smem:[#allocation0]]
  $region57: #{tpu_custom_call.1} parent=0
    _
  %s7 = ssub.s32 1, %s5
  %s8 = scalar_select 0, %s7, %s5
  $region1: #{tpu_custom_call.1} parent=0
    #allocation2 [shape = 'u8[32768]{0}', space=vmem, size = 0x8000, scoped, tag = 'input window, operand 0']
    #allocation3 [shape = 's32[2]{0}', space=sflag, size = 0x8, scoped, tag = 'scoped memory for tpu_custom_call.1']
    #allocation4 [shape = 's32[2]{0}', space=sflag, size = 0x8, scoped, tag = 'scoped memory for tpu_custom_call.1']
    #allocation5 [shape = 'u8[32768]{0}', space=vmem, size = 0x8000, scoped, tag = 'input window, operand 1']
    #allocation6 [shape = 's32[2]{0}', space=sflag, size = 0x8, scoped, tag = 'scoped memory for tpu_custom_call.1']
    #allocation7 [shape = 'u8[32768]{0}', space=vmem, size = 0x8000, scoped, tag = 'output window, operand 0']
    %9 = vsyncpa [#allocation3], 0
    %s10 = scalar_lea.sflag [#allocation3], 1
    %11 = vsyncpa %s10, 0
    %12 = vsyncpa [#allocation6], 0
    %s13 = scalar_lea.sflag [#allocation6], 1
    %14 = vsyncpa %s13, 0
    %15 = vsyncpa [#allocation4], 0
    %s16 = scalar_lea.sflag [#allocation4], 1
    %17 = vsyncpa %s16, 0
    loop: start=0, step=1, limit=4
    $region2: #{tpu_custom_call.1} parent=1 // loop_pre_header
      _
    $region3: #{tpu_custom_call.1} parent=1 // loop_header
      %s19 = sphi 0, %s23
      %p20 = scmp.ge.s32.totalorder %s19, 4
      %s29 = sphi 0, %s31
      %s32 = sphi 0, %s29
      %s33 = sphi 0, %s32
      %s49 = sphi 0, %s33
      %s55 = sphi 0, %s57
      %s58 = sphi 0, %s55
      %s59 = sphi 0, %s58
      %s75 = sphi 0, %s59
      %s79 = sphi 0, %s79
      %s81 = sphi 0, %s79
      %s82 = sphi 0, %s81
      %s96 = sphi 0, %s82
      %s100 = sphi 0, %s100
      %s102 = sphi 0, %s100
      %s103 = sphi 0, %s102
      %s117 = sphi 0, %s103
      %s123 = sphi 0, %s125
      %s126 = sphi 0, %s123
      %s127 = sphi 0, %s126
      %s143 = sphi 0, %s127
    $region4: #{tpu_custom_call.1} parent=1 // loop_header_branch
      %22 = sbr.rel (%p20) target = $region8
    $region5: #{tpu_custom_call.1} parent=1 // loop_body
      %s24 = ssub.s32 %s19, 1
      %s25 = ssub.s32 %s19, 2
      %s26 = sadd.s32 %s19, 1
      %s27 = ssub.s32 %s19, %s26
      %p28 = scmp.eq.s32.totalorder %s27, 0
      %s30 = sadd.s32 %s29, 1
      %s31 = scalar_select %p28, %s29, %s30
      %p34 = pneg %p28
      %p35 = scmp.eq.s32.totalorder %s19, 1
      %p36 = por %p34, %p35
      %p37 = scmp.ne.s32.totalorder %s29, %s32
      %p38 = scmp.eq.s32.totalorder %s19, 0
      %p39 = por %p37, %p38
      %p40 = scmp.ne.s32.totalorder %s29, %s32
      %p41 = scmp.eq.s32.totalorder %s24, 1
      %p42 = por %p40, %p41
      %p43 = scmp.ne.s32.totalorder %s32, %s33
      %p44 = scmp.eq.s32.totalorder %s24, 0
      %p45 = por %p43, %p44
      %p46 = scmp.ne.s32.totalorder %s32, %s33
      %p47 = scmp.eq.s32.totalorder %s25, 1
      %p48 = por %p46, %p47
      %p50 = scmp.ne.s32.totalorder %s33, %s49
      %p51 = scmp.eq.s32.totalorder %s25, 0
      %p52 = por %p50, %p51
      %s53 = ssub.s32 %s19, %s26
      %p54 = scmp.eq.s32.totalorder %s53, 0
      %s56 = sadd.s32 %s55, 1
      %s57 = scalar_select %p54, %s55, %s56
      %p60 = pneg %p54
      %p61 = scmp.eq.s32.totalorder %s19, 1
      %p62 = por %p60, %p61
      %p63 = scmp.ne.s32.totalorder %s55, %s58
      %p64 = scmp.eq.s32.totalorder %s19, 0
      %p65 = por %p63, %p64
      %p66 = scmp.ne.s32.totalorder %s55, %s58
      %p67 = scmp.eq.s32.totalorder %s24, 1
      %p68 = por %p66, %p67
      %p69 = scmp.ne.s32.totalorder %s58, %s59
      %p70 = scmp.eq.s32.totalorder %s24, 0
      %p71 = por %p69, %p70
      %p72 = scmp.ne.s32.totalorder %s58, %s59
      %p73 = scmp.eq.s32.totalorder %s25, 1
      %p74 = por %p72, %p73
      %p76 = scmp.ne.s32.totalorder %s59, %s75
      %p77 = scmp.eq.s32.totalorder %s25, 0
      %p78 = por %p76, %p77
      %s80 = sadd.s32 %s79, 1
      %p83 = scmp.eq.s32.totalorder %s19, 1
      %p84 = scmp.ne.s32.totalorder %s79, %s81
      %p85 = scmp.eq.s32.totalorder %s19, 0
      %p86 = por %p84, %p85
      %p87 = scmp.ne.s32.totalorder %s79, %s81
      %p88 = scmp.eq.s32.totalorder %s24, 1
      %p89 = por %p87, %p88
      %p90 = scmp.ne.s32.totalorder %s81, %s82
      %p91 = scmp.eq.s32.totalorder %s24, 0
      %p92 = por %p90, %p91
      %p93 = scmp.ne.s32.totalorder %s81, %s82
      %p94 = scmp.eq.s32.totalorder %s25, 1
      %p95 = por %p93, %p94
      %p97 = scmp.ne.s32.totalorder %s82, %s96
      %p98 = scmp.eq.s32.totalorder %s25, 0
      %p99 = por %p97, %p98
      %s101 = sadd.s32 %s100, 1
      %p104 = scmp.eq.s32.totalorder %s19, 1
      %p105 = scmp.ne.s32.totalorder %s100, %s102
      %p106 = scmp.eq.s32.totalorder %s19, 0
      %p107 = por %p105, %p106
      %p108 = scmp.ne.s32.totalorder %s100, %s102
      %p109 = scmp.eq.s32.totalorder %s24, 1
      %p110 = por %p108, %p109
      %p111 = scmp.ne.s32.totalorder %s102, %s103
      %p112 = scmp.eq.s32.totalorder %s24, 0
      %p113 = por %p111, %p112
      %p114 = scmp.ne.s32.totalorder %s102, %s103
      %p115 = scmp.eq.s32.totalorder %s25, 1
      %p116 = por %p114, %p115
      %p118 = scmp.ne.s32.totalorder %s103, %s117
      %p119 = scmp.eq.s32.totalorder %s25, 0
      %p120 = por %p118, %p119
      %s121 = ssub.s32 %s19, %s26
      %p122 = scmp.eq.s32.totalorder %s121, 0
      %s124 = sadd.s32 %s123, 1
      %s125 = scalar_select %p122, %s123, %s124
      %p128 = pneg %p122
      %p129 = scmp.eq.s32.totalorder %s19, 1
      %p130 = por %p128, %p129
      %p131 = scmp.ne.s32.totalorder %s123, %s126
      %p132 = scmp.eq.s32.totalorder %s19, 0
      %p133 = por %p131, %p132
      %p134 = scmp.ne.s32.totalorder %s123, %s126
      %p135 = scmp.eq.s32.totalorder %s24, 1
      %p136 = por %p134, %p135
      %p137 = scmp.ne.s32.totalorder %s126, %s127
      %p138 = scmp.eq.s32.totalorder %s24, 0
      %p139 = por %p137, %p138
      %p140 = scmp.ne.s32.totalorder %s126, %s127
      %p141 = scmp.eq.s32.totalorder %s25, 1
      %p142 = por %p140, %p141
      %p144 = scmp.ne.s32.totalorder %s127, %s143
      %p145 = scmp.eq.s32.totalorder %s25, 0
      %p146 = por %p144, %p145
      %p147 = scmp.le.s32.totalorder 1, %s19
      %p148 = scmp.lt.s32.totalorder %s19, 3
      %p149 = pnand %p147, %p148
      %p150 = pneg %p149
      // Predicated region
      $region9: #{tpu_custom_call.1} parent=5 // pred_check
        _
      $region10: #{tpu_custom_call.1} parent=5 // pred_check_branch
        %152 = sbr.rel (%p149) target = $region12
      $region11: #{tpu_custom_call.1} parent=5 // pred_region
        %s153 = ssub.s32 %s19, 1
        // Predicated region
        $region13: #{tpu_custom_call.1} parent=11 // pred_check
          %p154 = pneg %p92
        $region14: #{tpu_custom_call.1} parent=11 // pred_check_branch
          %156 = sbr.rel (%p154) target = $region16
        $region15: #{tpu_custom_call.1} parent=11 // pred_region
          _
        $region16: #{tpu_custom_call.1} parent=11 // pred_fallthru
          _
        // Predicated region
        $region17: #{tpu_custom_call.1} parent=11 // pred_check
          %p157 = pneg %p113
        $region18: #{tpu_custom_call.1} parent=11 // pred_check_branch
          %159 = sbr.rel (%p157) target = $region20
        $region19: #{tpu_custom_call.1} parent=11 // pred_region
          _
        $region20: #{tpu_custom_call.1} parent=11 // pred_fallthru
          _
      $region12: #{tpu_custom_call.1} parent=5 // pred_fallthru
        _
      %p160 = scmp.lt.s32.totalorder %s19, 2
      // Predicated region
      $region21: #{tpu_custom_call.1} parent=5 // pred_check
        %p161 = pneg %p160
      $region22: #{tpu_custom_call.1} parent=5 // pred_check_branch
        %163 = sbr.rel (%p161) target = $region24
      $region23: #{tpu_custom_call.1} parent=5 // pred_region
        // Predicated region
        $region25: #{tpu_custom_call.1} parent=23 // pred_check
          %p164 = pneg %p39
        $region26: #{tpu_custom_call.1} parent=23 // pred_check_branch
          %166 = sbr.rel (%p164) target = $region28
        $region27: #{tpu_custom_call.1} parent=23 // pred_region
          %s167 = sand.u32 %s29, 1
          %s168 = scalar_lea.sflag [#allocation3], %s167
          %s169 = sand.u32 %s29, 1
          %s170 = smul.addr %s169, 32
          %s171 = scalar_lea.vmem [#allocation2], %s170
          %s173 = ssub.s32 512, 512
          %174 = vsyncadd %s168, %s173
          %s175 = smul.addr %s19, 4
          %s176 = smul.addr %s175, 128
          %s177 = scalar_lea.hbm %s0, %s176
          %s178 = sshll.u32 %s171, 4
          %s179 = int_to_ptr.vmem [resolvable:$true] %s178
          %184 = dma.hbm_to_vmem [thread:$0]  %s177, 512, %s179, %s168, 256, 256, 16
        $region28: #{tpu_custom_call.1} parent=23 // pred_fallthru
          _
        // Predicated region
        $region29: #{tpu_custom_call.1} parent=23 // pred_check
          %p185 = pneg %p65
        $region30: #{tpu_custom_call.1} parent=23 // pred_check_branch
          %187 = sbr.rel (%p185) target = $region32
        $region31: #{tpu_custom_call.1} parent=23 // pred_region
          %s188 = sand.u32 %s55, 1
          %s189 = scalar_lea.sflag [#allocation6], %s188
          %s190 = sand.u32 %s55, 1
          %s191 = smul.addr %s190, 32
          %s192 = scalar_lea.vmem [#allocation5], %s191
          %s194 = ssub.s32 512, 512
          %195 = vsyncadd %s189, %s194
          %s196 = smul.addr %s19, 4
          %s197 = smul.addr %s196, 128
          %s198 = scalar_lea.hbm %s1, %s197
          %s199 = sshll.u32 %s192, 4
          %s200 = int_to_ptr.vmem [resolvable:$true] %s199
          %205 = dma.hbm_to_vmem [thread:$0]  %s198, 512, %s200, %s189, 256, 256, 16
        $region32: #{tpu_custom_call.1} parent=23 // pred_fallthru
          _
      $region24: #{tpu_custom_call.1} parent=5 // pred_fallthru
        _
      %p206 = scmp.le.s32.totalorder 1, %s19
      %p207 = scmp.lt.s32.totalorder %s19, 3
      %p208 = pnand %p206, %p207
      %p209 = pneg %p208
      // Predicated region
      $region33: #{tpu_custom_call.1} parent=5 // pred_check
        _
      $region34: #{tpu_custom_call.1} parent=5 // pred_check_branch
        %211 = sbr.rel (%p208) target = $region36
      $region35: #{tpu_custom_call.1} parent=5 // pred_region
        %s212 = ssub.s32 %s19, 1
        %s213 = sand.u32 %s32, 1
        %s214 = scalar_lea.sflag [#allocation3], %s213
        %s215 = sand.u32 %s32, 1
        %s216 = smul.addr %s215, 32
        %s217 = scalar_lea.vmem [#allocation2], %s216
        // Predicated region
        $region37: #{tpu_custom_call.1} parent=35 // pred_check
          %p218 = pneg %p45
        $region38: #{tpu_custom_call.1} parent=35 // pred_check_branch
          %220 = sbr.rel (%p218) target = $region40
        $region39: #{tpu_custom_call.1} parent=35 // pred_region
          %221 = dma.done %s214, 512
        $region40: #{tpu_custom_call.1} parent=35 // pred_fallthru
          _
        %s222 = sand.u32 %s58, 1
        %s223 = scalar_lea.sflag [#allocation6], %s222
        %s224 = sand.u32 %s58, 1
        %s225 = smul.addr %s224, 32
        %s226 = scalar_lea.vmem [#allocation5], %s225
        // Predicated region
        $region41: #{tpu_custom_call.1} parent=35 // pred_check
          %p227 = pneg %p71
        $region42: #{tpu_custom_call.1} parent=35 // pred_check_branch
          %229 = sbr.rel (%p227) target = $region44
        $region43: #{tpu_custom_call.1} parent=35 // pred_region
          %230 = dma.done %s223, 512
        $region44: #{tpu_custom_call.1} parent=35 // pred_fallthru
          _
        %s231 = sand.u32 %s32, 1
        %s232 = scalar_lea.sflag [#allocation3], %s231
        %s233 = sand.u32 %s32, 1
        %s234 = smul.addr %s233, 32
        %s235 = scalar_lea.vmem [#allocation2], %s234
        %p236 = pneg %p45
        %p237 = pneg %p42
        %s238 = sand.u32 %s58, 1
        %s239 = scalar_lea.sflag [#allocation6], %s238
        %s240 = sand.u32 %s58, 1
        %s241 = smul.addr %s240, 32
        %s242 = scalar_lea.vmem [#allocation5], %s241
        %p243 = pneg %p71
        %p244 = pneg %p68
        %p245 = pneg %p92
        %p246 = pneg %p89
        %p247 = pneg %p113
        %p248 = pneg %p110
        %p249 = pneg %p139
        %p250 = pneg %p136
        %s251 = sand.u32 %s126, 1
        %s252 = scalar_lea.sflag [#allocation4], %s251
        %s253 = sand.u32 %s126, 1
        %s254 = smul.addr %s253, 32
        %s255 = scalar_lea.vmem [#allocation7], %s254
        %v256 = vld [vmem:[%s217] sm:$0xff]
        %v257 = vld [vmem:[%s217 + $0x8] sm:$0xff]
        %v258 = vld [vmem:[%s217 + $0x10] sm:$0xff]
        %v259 = vld [vmem:[%s217 + $0x18] sm:$0xff]
        %v260 = vld [vmem:[%s226] sm:$0xff]
        %v261 = vld [vmem:[%s226 + $0x8] sm:$0xff]
        %v262 = vld [vmem:[%s226 + $0x10] sm:$0xff]
        %v263 = vld [vmem:[%s226 + $0x18] sm:$0xff]
        %v264 = vadd.f32 %v256, %v257
        %265 = vadd.xlane.f32.xlu0 %v264
        %v266 = vpop.xlane.xlu0 %265
        %v267 = vadd.f32 %v258, %v259
        %268 = vadd.xlane.f32.xlu0 %v267
        %v269 = vpop.xlane.xlu0 %268
        %v270 = vmul.f32 %v256, %v256
        %v271 = vmul.f32 %v257, %v257
        %v272 = vmul.f32 %v258, %v258
        %v273 = vmul.f32 %v259, %v259
        %v274 = vadd.f32 %v270, %v271
        %275 = vadd.xlane.f32.xlu0 %v274
        %v276 = vpop.xlane.xlu0 %275
        %v277 = vadd.f32 %v272, %v273
        %278 = vadd.xlane.f32.xlu0 %v277
        %v279 = vpop.xlane.xlu0 %278
        %v280 = vadd.f32 %v260, %v261
        %281 = vadd.xlane.f32.xlu0 %v280
        %v282 = vpop.xlane.xlu0 %281
        %v283 = vadd.f32 %v262, %v263
        %284 = vadd.xlane.f32.xlu0 %v283
        %v285 = vpop.xlane.xlu0 %284
        %v286 = vmul.f32 %v260, %v260
        %v287 = vmul.f32 %v261, %v261
        %v288 = vmul.f32 %v262, %v262
        %v289 = vmul.f32 %v263, %v263
        %v290 = vadd.f32 %v286, %v287
        %291 = vadd.xlane.f32.xlu0 %v290
        %v292 = vpop.xlane.xlu0 %291
        %v293 = vadd.f32 %v288, %v289
        %294 = vadd.xlane.f32.xlu0 %v293
        %v295 = vpop.xlane.xlu0 %294
        %v296 = vmul.f32 %v266, 0.00390625
        %v297 = vmul.f32 %v269, 0.00390625
        %v298 = vmul.f32 %v266, %v296
        %v299 = vmul.f32 %v269, %v297
        %v300 = vsub.f32 %v276, %v298
        %v301 = vsub.f32 %v279, %v299
        %v302 = vmul.f32 %v300, 0.003921569
        %v303 = vmul.f32 %v301, 0.003921569
        %v304 = vmax.f32 %v302, 0.0
        %v305 = vmax.f32 %v303, 0.0
        %v306 = vmul.f32 %v282, 0.00390625
        %v307 = vmul.f32 %v285, 0.00390625
        %v308 = vmul.f32 %v282, %v306
        %v309 = vmul.f32 %v285, %v307
        %v310 = vsub.f32 %v292, %v308
        %v311 = vsub.f32 %v295, %v309
        %v312 = vmul.f32 %v310, 0.003921569
        %v313 = vmul.f32 %v311, 0.003921569
        %v314 = vmax.f32 %v312, 0.0
        %v315 = vmax.f32 %v313, 0.0
        %v316 = vadd.f32 %v314, 1e-05
        %v317 = vadd.f32 %v315, 1e-05
        %v318 = vrsqrt.pop %v316
        %v319 = vmul.f32 %v316, %v318
        %vm320 = vcmp.eq.f32.partialorder %v316, inf
        %v321 = vsel %vm320, %v316, %v319
        %vm322 = vcmp.eq.f32.partialorder %v316, 0.0
        %v323 = vand.u32 %v316, 2147483648
        %v324 = vsel %vm322, %v323, %v321
        %v325 = vrsqrt.pop %v317
        %v326 = vmul.f32 %v317, %v325
        %vm327 = vcmp.eq.f32.partialorder %v317, inf
        %v328 = vsel %vm327, %v317, %v326
        %vm329 = vcmp.eq.f32.partialorder %v317, 0.0
        %v330 = vand.u32 %v317, 2147483648
        %v331 = vsel %vm329, %v330, %v328
        %v332 = vld [vmem:[%s2] sm:$0xff]
        %v333 = vld [vmem:[%s2 + $0x8] sm:$0xff]
        %v334 = vld [vmem:[%s3] sm:$0xff]
        %v335 = vld [vmem:[%s3 + $0x8] sm:$0xff]
        %v336 = vmul.f32 %v296, %v332
        %v337 = vmul.f32 %v297, %v333
        %vm338 = vcmask 15360
        %v339 = vsel %vm338, %v336, 0.0
        %v340 = vsel %vm338, %v337, 0.0
        %v341 = vadd.f32 %v339, %v340
        %v342 = vrot.slane %v341, 4
        %v343 = vadd.f32 %v341, %v342
        %v344 = vrot.slane %v343, 2
        %v345 = vadd.f32 %v343, %v344
        %v346 = vrot.slane %v345, 1
        %v347 = vadd.f32 %v345, %v346
        %v348 = vmax.f32 %v347, 0.0
        %v349 = vmul.f32 %v334, %v348
        %v350 = vmul.f32 %v335, %v348
        %v351 = vsel %vm338, %v349, 0.0
        %352 = vadd.xlane.f32.xlu0 %v351
        %v353 = vpop.xlane.xlu0 %352
        %v354 = vsel %vm338, %v350, 0.0
        %355 = vadd.xlane.f32.xlu0 %v354
        %v356 = vpop.xlane.xlu0 %355
        %v357 = vxor.u32 %v353, 2147483648
        %v358 = vxor.u32 %v356, 2147483648
        %v359 = vmul.f32 %v357, 1.442695
        %v360 = vpow.pop %v359
        %v361 = vmul.f32 %v358, 1.442695
        %v362 = vpow.pop %v361
        %v363 = vadd.f32 %v360, 1.0
        %v364 = vadd.f32 %v362, 1.0
        %v365 = vrcp.pop %v363
        %v366 = vmul.f32 1.0, %v365
        %v367 = vrcp.pop %v364
        %v368 = vmul.f32 1.0, %v367
        %v369 = vmul.f32 %v366, %v366
        %v370 = vmul.f32 %v368, %v368
        %v371 = vmul.f32 %v369, %v304
        %v372 = vmul.f32 %v370, %v305
        %v373 = vadd.f32 %v371, 1e-05
        %v374 = vadd.f32 %v372, 1e-05
        %v375 = vrsqrt.pop %v373
        %v376 = vrsqrt.pop %v374
        %v377 = vmul.f32 %v366, %v324
        %v378 = vmul.f32 %v368, %v331
        %v379 = vmul.f32 %v377, %v375
        %v380 = vmul.f32 %v378, %v376
        %v381 = vmul.f32 %v296, %v379
        %v382 = vmul.f32 %v297, %v380
        %v383 = vsub.f32 %v306, %v381
        %v384 = vsub.f32 %v307, %v382
        %v385 = vmul.f32 %v256, %v379
        %v386 = vmul.f32 %v257, %v379
        %v387 = vmul.f32 %v258, %v380
        %v388 = vmul.f32 %v259, %v380
        %v389 = vadd.f32 %v385, %v383
        %v390 = vadd.f32 %v386, %v383
        %v391 = vadd.f32 %v387, %v384
        %v392 = vadd.f32 %v388, %v384
        %393 = vst [vmem:[%s255] sm:$0xff] %v389
        %394 = vst [vmem:[%s255 + $0x8] sm:$0xff] %v390
        %395 = vst [vmem:[%s255 + $0x10] sm:$0xff] %v391
        %396 = vst [vmem:[%s255 + $0x18] sm:$0xff] %v392
        %s397 = sand.u32 %s126, 1
        %s398 = scalar_lea.sflag [#allocation4], %s397
        %s399 = sand.u32 %s126, 1
        %s400 = smul.addr %s399, 32
        %s401 = scalar_lea.vmem [#allocation7], %s400
        // Predicated region
        $region45: #{tpu_custom_call.1} parent=35 // pred_check
          %p402 = pneg %p136
        $region46: #{tpu_custom_call.1} parent=35 // pred_check_branch
          %404 = sbr.rel (%p402) target = $region48
        $region47: #{tpu_custom_call.1} parent=35 // pred_region
          %s406 = ssub.s32 512, 512
          %407 = vsyncadd %s398, %s406
          %s408 = smul.addr %s24, 4
          %s409 = smul.addr %s408, 128
          %s410 = scalar_lea.hbm %s4, %s409
          %s411 = sshll.u32 %s401, 4
          %s412 = int_to_ptr.vmem [resolvable:$true] %s411
          %417 = dma.vmem_to_hbm [thread:$0]  %s412, 512, %s410, %s398, 256, 256, 16
        $region48: #{tpu_custom_call.1} parent=35 // pred_fallthru
          _
      $region36: #{tpu_custom_call.1} parent=5 // pred_fallthru
        _
      %p418 = scmp.le.s32.totalorder 2, %s19
      // Predicated region
      $region49: #{tpu_custom_call.1} parent=5 // pred_check
        %p419 = pneg %p418
      $region50: #{tpu_custom_call.1} parent=5 // pred_check_branch
        %421 = sbr.rel (%p419) target = $region52
      $region51: #{tpu_custom_call.1} parent=5 // pred_region
        %s422 = ssub.s32 %s19, 2
        // Predicated region
        $region53: #{tpu_custom_call.1} parent=51 // pred_check
          %p423 = pneg %p142
        $region54: #{tpu_custom_call.1} parent=51 // pred_check_branch
          %425 = sbr.rel (%p423) target = $region56
        $region55: #{tpu_custom_call.1} parent=51 // pred_region
          %s426 = sand.u32 %s127, 1
          %s427 = scalar_lea.sflag [#allocation4], %s426
          %s428 = sand.u32 %s127, 1
          %s429 = smul.addr %s428, 32
          %s430 = scalar_lea.vmem [#allocation7], %s429
          %431 = dma.done %s427, 512
        $region56: #{tpu_custom_call.1} parent=51 // pred_fallthru
          _
      $region52: #{tpu_custom_call.1} parent=5 // pred_fallthru
        _
    $region6: #{tpu_custom_call.1} parent=1 // loop_footer
      %s23 = sadd.s32 1, %s19
    $region7: #{tpu_custom_call.1} parent=1 // loop_footer_branch
      %18 = sbr.rel target = $region3
    $region8: #{tpu_custom_call.1} parent=1 // loop_exit
      _
    %432 = vsyncpa [#allocation3], 1
    %s433 = scalar_lea.sflag [#allocation3], 1
    %434 = vsyncpa %s433, 1
    %435 = vsyncpa [#allocation6], 1
    %s436 = scalar_lea.sflag [#allocation6], 1
    %437 = vsyncpa %s436, 1
    %438 = vsyncpa [#allocation4], 1
    %s439 = scalar_lea.sflag [#allocation4], 1
    %440 = vsyncpa %s439, 1

</llo_original>
